<compile_context>
chip_gen: v7x
topology: tpu7x:2x2x1
jax: 0.10.0
libtpu: 0.0.40
codegen_flags: <defaults>
</compile_context>

<pallas_src>
import jax
import jax.numpy as jnp
from jax.experimental import pallas as pl
from jax.experimental.pallas import tpu as pltpu


_LANE = 128
_SUBLANE = 8
_SMALL_PROBLEM_CUTOFF = 2 ** 20  # M*N*K below this -> plain XLA dot.


def _round_up(v, m):
    return (v + m - 1) // m * m


def _round_down(v, m):
    return max(m, (v // m) * m)


def _chip_kind():
    try:
        return jax.devices()[0].device_kind.lower()
    except Exception:
        return ""


def _default_config(kind):
    # (tm, tn, tk, vmem_limit_bytes). f32 working sets incl. double buffers:
    #   1024x1024, tk=512: ~20 MiB (fits v7x 64 MiB/TC with headroom; MXU-bound)
    #   512x512,   tk=512: ~7 MiB  (fits v5e's 16 MiB scoped default)
    if "v7" in kind:
        return 1024, 1024, 512, 48 << 20
    if "v6" in kind:
        return 1024, 1024, 512, 64 << 20
    if "v5" in kind:
        return 512, 512, 512, None
    return 512, 512, 512, None


def _pick_tile(dim, target, gran):
    """Largest tile <= target (multiple of gran) minimizing round-up padding."""
    target = _round_down(min(target, dim), gran)
    best, best_padded = target, _round_up(dim, target)
    cand = target
    while cand > gran:
        cand = _round_down(cand // 2, gran)
        padded = _round_up(dim, cand)
        if padded < best_padded:
            best, best_padded = cand, padded
    return best


def _tlinear_bias_kernel(x_ref, w_ref, b_ref, o_ref):
    # x_ref: (tm, tk), w_ref: (tk, tn) pre-transposed, b_ref: (1, tn),
    # o_ref: (tm, tn) f32, VMEM-resident across the K grid axis.
    k = pl.program_id(2)
    partial = jnp.dot(x_ref[...], w_ref[...], preferred_element_type=jnp.float32)

    @pl.when(k == 0)
    def _():
        # bias (1, tn) broadcasts over tm rows; added exactly once per out tile.
        o_ref[...] = b_ref[...] + partial

    @pl.when(k != 0)
    def _():
        o_ref[...] += partial


def _tlinear_nobias_kernel(x_ref, w_ref, o_ref):
    k = pl.program_id(2)
    partial = jnp.dot(x_ref[...], w_ref[...], preferred_element_type=jnp.float32)

    @pl.when(k == 0)
    def _():
        o_ref[...] = partial

    @pl.when(k != 0)
    def _():
        o_ref[...] += partial


def tlinear_forward(x, weight, bias=None, *, tm=None, tn=None, tk=None,
                    force_pallas=False):
    """Pallas implementation of TLinear.forward.

    x:      (M, K) any float dtype (cast to f32, matching input.float())
    weight: (N, K) -> out_features x in_features
    bias:   (N,) or None
    returns (M, N) float32
    """
    x = x.astype(jnp.float32)
    weight = weight.astype(jnp.float32)
    M, K = x.shape
    N, Kw = weight.shape
    assert K == Kw, "weight must be (out_features, in_features)"

    w_t = weight.T  # (K, N): NN layout -> no per-step RHS transpose in-kernel.
    if bias is not None:
        bias = bias.astype(jnp.float32)

    # Tiny-problem bypass: padding + pallas_call fixed overhead dominates.
    if not force_pallas and M * N * K < _SMALL_PROBLEM_CUTOFF:
        out = jnp.dot(x, w_t, preferred_element_type=jnp.float32)
        if bias is not None:
            out = out + bias[None, :]
        return out

    kind = _chip_kind()
    d_tm, d_tn, d_tk, vmem_limit = _default_config(kind)
    tm = d_tm if tm is None else _round_down(tm, _SUBLANE)
    tn = d_tn if tn is None else _round_down(tn, _LANE)
    tk = d_tk if tk is None else _round_down(tk, _LANE)

    # Pad to clean vreg / lane-dense-store granularity, then pick tiles that
    # minimize extra tile-multiple padding.
    Mp = _round_up(M, _SUBLANE)
    Kp = _round_up(K, _LANE)
    Np = _round_up(N, _LANE)
    tm = _pick_tile(Mp, tm, _SUBLANE)
    tn = _pick_tile(Np, tn, _LANE)
    tk = _pick_tile(Kp, tk, _LANE)

    # v7x megacore: ensure >= 2 parallel output tiles so both TCs get work.
    if ("v7" in kind
            and _round_up(Mp, tm) // tm == 1
            and _round_up(Np, tn) // tn == 1
            and Np >= 2 * _LANE):
        tn = _round_down(Np // 2, _LANE)

    Mp = _round_up(Mp, tm)
    Np = _round_up(Np, tn)
    Kp = _round_up(Kp, tk)

    x_p = x if (Mp == M and Kp == K) else jnp.pad(x, ((0, Mp - M), (0, Kp - K)))
    w_p = w_t if (Kp == K and Np == N) else jnp.pad(
        w_t, ((0, Kp - K), (0, Np - N)))

    grid = (Mp // tm, Np // tn, Kp // tk)
    x_spec = pl.BlockSpec((tm, tk), lambda i, j, k: (i, k))
    w_spec = pl.BlockSpec((tk, tn), lambda i, j, k: (k, j))
    out_spec = pl.BlockSpec((tm, tn), lambda i, j, k: (i, j))

    cparams = pltpu.CompilerParams(
        dimension_semantics=("parallel", "parallel", "arbitrary"),
        vmem_limit_bytes=vmem_limit)
    cost = pl.CostEstimate(
        flops=2 * M * N * K,
        transcendentals=0,
        bytes_accessed=4 * (M * K + N * K + M * N))

    if bias is None:
        out_p = pl.pallas_call(
            _tlinear_nobias_kernel,
            out_shape=jax.ShapeDtypeStruct((Mp, Np), jnp.float32),
            grid_spec=pltpu.PrefetchScalarGridSpec(
                num_scalar_prefetch=0,
                grid=grid,
                in_specs=[x_spec, w_spec],
                out_specs=out_spec,
            ),
            compiler_params=cparams,
            cost_estimate=cost,
        )(x_p, w_p)
    else:
        b_row = bias.reshape(1, N)
        b_p = b_row if Np == N else jnp.pad(b_row, ((0, 0), (0, Np - N)))
        b_spec = pl.BlockSpec((1, tn), lambda i, j, k: (0, j))
        out_p = pl.pallas_call(
            _tlinear_bias_kernel,
            out_shape=jax.ShapeDtypeStruct((Mp, Np), jnp.float32),
            grid_spec=pltpu.PrefetchScalarGridSpec(
                num_scalar_prefetch=0,
                grid=grid,
                in_specs=[x_spec, w_spec, b_spec],
                out_specs=out_spec,
            ),
            compiler_params=cparams,
            cost_estimate=cost,
        )(x_p, w_p, b_p)

    if Mp == M and Np == N:
        return out_p
    return out_p[:M, :N]


if __name__ == "__main__":
    key = jax.random.PRNGKey(0)
    k_x, k_w, k_b, k_x2, k_w2, k_b2 = jax.random.split(key, 6)

    # 1) Small shapes consistent with the module: batch=8, in=32, out=16.
    #    force_pallas=True so the Pallas kernel itself is exercised here.
    M, K, N = 8, 32, 16
    x = jax.random.normal(k_x, (M, K), dtype=jnp.float32)
    weight = jax.random.uniform(k_w, (N, K), minval=-0.1, maxval=0.1,
                                dtype=jnp.float32)
    bias = jax.random.uniform(k_b, (N,), minval=-0.1, maxval=0.1,
                              dtype=jnp.float32)

    ref = x @ weight.T + bias[None, :]
    out = jax.block_until_ready(tlinear_forward(x, weight, bias,
                                                force_pallas=True))
    assert out.shape == (M, N)
    assert jnp.allclose(out, ref, atol=1e-5, rtol=1e-5)

    # Default path (tiny-problem XLA fallback) must match too.
    out_fb = jax.block_until_ready(tlinear_forward(x, weight, bias))
    assert jnp.allclose(out_fb, ref, atol=1e-5, rtol=1e-5)

    # 2) Multi-tile grid exercising the K-reduction accumulation into the
    #    resident output block and the once-only bias init (grid 4x2x3).
    M2, K2, N2 = 256, 384, 256
    x2 = jax.random.normal(k_x2, (M2, K2), dtype=jnp.float32)
    w2 = jax.random.uniform(k_w2, (N2, K2), minval=-0.1, maxval=0.1,
                            dtype=jnp.float32)
    b2 = jax.random.uniform(k_b2, (N2,), minval=-0.1, maxval=0.1,
                            dtype=jnp.float32)

    out2 = jax.block_until_ready(
        tlinear_forward(x2, w2, b2, tm=64, tn=128, tk=128, force_pallas=True))
    ref2 = x2 @ w2.T + b2[None, :]
    assert jnp.allclose(out2, ref2, atol=1e-4, rtol=1e-4)

    # 3) No-bias path with chip-default (auto-clamped) tiles.
    out3 = jax.block_until_ready(
        tlinear_forward(x2, w2, None, force_pallas=True))
    ref3 = x2 @ w2.T
    assert jnp.allclose(out3, ref3, atol=1e-4, rtol=1e-4)

    print("KERNEL_OK")
</pallas_src>

<mosaic_0001>
module attributes {stable_mosaic.version = 11 : i64} {
  func.func @_tlinear_bias_kernel(%arg0: i32, %arg1: i32, %arg2: i32, %arg3: memref<8x128xf32, #tpu.memory_space<vmem>>, %arg4: memref<128x128xf32, #tpu.memory_space<vmem>>, %arg5: memref<1x128xf32, #tpu.memory_space<vmem>>, %arg6: memref<8x128xf32, #tpu.memory_space<vmem>>) attributes {dimension_semantics = [#tpu.dimension_semantics<parallel>, #tpu.dimension_semantics<parallel>, #tpu.dimension_semantics<arbitrary>], iteration_bounds = array<i64: 1, 1, 1>, scalar_prefetch = 0 : i64, scratch_operands = 0 : i64, tpu.core_type = #tpu.core_type<tc>, window_params = [{transform_indices = @transform_0, window_bounds = array<i64: 8, 128>}, {transform_indices = @transform_1, window_bounds = array<i64: 128, 128>}, {transform_indices = @transform_2, window_bounds = array<i64: 1, 128>}, {transform_indices = @transform_3, window_bounds = array<i64: 8, 128>}]} {
    %c0 = arith.constant 0 : index
    %c0_0 = arith.constant 0 : index
    %0 = vector.load %arg3[%c0, %c0_0] : memref<8x128xf32, #tpu.memory_space<vmem>>, vector<8x128xf32>
    %c0_1 = arith.constant 0 : index
    %c0_2 = arith.constant 0 : index
    %1 = vector.load %arg4[%c0_1, %c0_2] : memref<128x128xf32, #tpu.memory_space<vmem>>, vector<128x128xf32>
    %cst = arith.constant dense<0.000000e+00> : vector<8x128xf32>
    %2 = tpu.matmul %0, %1, %cst {dimension_numbers = #tpu.dot_dimension_numbers<[1], [0], [0], [1], [0, 0, 1, 1], [], []>} : vector<8x128xf32>, vector<128x128xf32>, vector<8x128xf32> -> vector<8x128xf32>
    %c0_i32 = arith.constant 0 : i32
    %3 = arith.cmpi eq, %arg2, %c0_i32 : i32
    %4 = arith.extui %3 : i1 to i32
    %c0_i32_3 = arith.constant 0 : i32
    %5 = arith.cmpi ne, %4, %c0_i32_3 : i32
    scf.if %5 {
      %c0_6 = arith.constant 0 : index
      %c0_7 = arith.constant 0 : index
      %9 = vector.load %arg5[%c0_6, %c0_7] : memref<1x128xf32, #tpu.memory_space<vmem>>, vector<1x128xf32>
      %10 = vector.broadcast %9 : vector<1x128xf32> to vector<8x128xf32>
      %11 = arith.addf %10, %2 : vector<8x128xf32>
      %c0_8 = arith.constant 0 : index
      %c0_9 = arith.constant 0 : index
      %12 = vector.load %arg6[%c0_8, %c0_9] : memref<8x128xf32, #tpu.memory_space<vmem>>, vector<8x128xf32>
      tpu.vector_store %arg6[%c0_8, %c0_9], %11 {strides = array<i32>} : memref<8x128xf32, #tpu.memory_space<vmem>>, vector<8x128xf32>,
    } else {
    }
    %c0_i32_4 = arith.constant 0 : i32
    %6 = arith.cmpi ne, %arg2, %c0_i32_4 : i32
    %7 = arith.extui %6 : i1 to i32
    %c0_i32_5 = arith.constant 0 : i32
    %8 = arith.cmpi ne, %7, %c0_i32_5 : i32
    scf.if %8 {
      %c0_6 = arith.constant 0 : index
      %c0_7 = arith.constant 0 : index
      %9 = vector.load %arg6[%c0_6, %c0_7] : memref<8x128xf32, #tpu.memory_space<vmem>>, vector<8x128xf32>
      %10 = arith.addf %9, %2 : vector<8x128xf32>
      %c0_8 = arith.constant 0 : index
      %c0_9 = arith.constant 0 : index
      %11 = vector.load %arg6[%c0_8, %c0_9] : memref<8x128xf32, #tpu.memory_space<vmem>>, vector<8x128xf32>
      tpu.vector_store %arg6[%c0_8, %c0_9], %10 {strides = array<i32>} : memref<8x128xf32, #tpu.memory_space<vmem>>, vector<8x128xf32>,
    } else {
    }
    return
  }
  func.func @transform_0(%arg0: i32, %arg1: i32, %arg2: i32) -> (i32, i32) {
    %c0_i32 = arith.constant 0 : i32
    return %arg0, %arg2 : i32, i32
  }
  func.func @transform_1(%arg0: i32, %arg1: i32, %arg2: i32) -> (i32, i32) {
    %c0_i32 = arith.constant 0 : i32
    return %arg2, %arg1 : i32, i32
  }
  func.func @transform_2(%arg0: i32, %arg1: i32, %arg2: i32) -> (i32, i32) {
    %c0_i32 = arith.constant 0 : i32
    %c0_i32_0 = arith.constant 0 : i32
    return %c0_i32, %arg1 : i32, i32
  }
  func.func @transform_3(%arg0: i32, %arg1: i32, %arg2: i32) -> (i32, i32) {
    %c0_i32 = arith.constant 0 : i32
    return %arg0, %arg1 : i32, i32
  }
}

</mosaic_0001>

<llo_original>
// kernel: tpu_custom_call.1
$region0: #{tpu_custom_call.1}
  #allocation0 [shape = 'u32[]', space=smem, size = 0x4, offset = 0x4, fixed_abs, tag = 'smem constant byte address 0x4 - core index']
  #allocation1 [shape = 'u32[144,128]{1,0:T(1,128)}', space=vmem, size = 0x12000, scoped, tag = 'internal scratch']
  %s0 = inlined_call_operand.hbm [shape: f32[8,128], index: 0, kind: input, shape index: {}]
  %s1 = inlined_call_operand.hbm [shape: f32[128,128], index: 1, kind: input, shape index: {}]
  %s2 = inlined_call_operand.vmem [shape: f32[1,128], index: 2, kind: input, shape index: {}]
  %s3 = inlined_call_operand.hbm [shape: f32[8,128], index: 3, kind: output, shape index: {}]
  %s4 = sld [smem:[#allocation0]]
  $region38: #{tpu_custom_call.1} parent=0
    _
  %s6 = ssub.s32 1, %s4
  %s7 = scalar_select 0, %s6, %s4
  $region1: #{tpu_custom_call.1} parent=0
    #allocation2 [shape = 'u8[4096]{0}', space=vmem, size = 0x1000, scoped, tag = 'input window, operand 0, single buffered']
    #allocation3 [shape = 's32[1]{0}', space=sflag, size = 0x4, scoped, tag = 'scoped memory for tpu_custom_call.1']
    #allocation4 [shape = 's32[1]{0}', space=sflag, size = 0x4, scoped, tag = 'scoped memory for tpu_custom_call.1']
    #allocation5 [shape = 'u8[65536]{0}', space=vmem, size = 0x10000, scoped, tag = 'input window, operand 1, single buffered']
    #allocation6 [shape = 's32[1]{0}', space=sflag, size = 0x4, scoped, tag = 'scoped memory for tpu_custom_call.1']
    #allocation7 [shape = 'u8[4096]{0}', space=vmem, size = 0x1000, scoped, tag = 'output window, operand 0, single buffered']
    %8 = vsyncpa [#allocation3], 0
    %9 = vsyncpa [#allocation6], 0
    %10 = vsyncpa [#allocation4], 0
    // Predicated region
    $region2: #{tpu_custom_call.1} parent=1 // pred_check
      _
    $region3: #{tpu_custom_call.1} parent=1 // pred_check_branch
      %12 = sbr.rel (0) target = $region5
    $region4: #{tpu_custom_call.1} parent=1 // pred_region
      %s14 = ssub.s32 128, 128
      %15 = vsyncadd [#allocation3], %s14
      %s17 = sshll.u32 [#allocation2], 4
      %s18 = int_to_ptr.vmem [resolvable:$true] %s17
      %20 = dma.hbm_to_vmem [thread:$0]  %s0, 128, %s18, [#allocation3]
    $region5: #{tpu_custom_call.1} parent=1 // pred_fallthru
      _
    // Predicated region
    $region6: #{tpu_custom_call.1} parent=1 // pred_check
      _
    $region7: #{tpu_custom_call.1} parent=1 // pred_check_branch
      %22 = sbr.rel (0) target = $region9
    $region8: #{tpu_custom_call.1} parent=1 // pred_region
      %s24 = ssub.s32 2048, 2048
      %25 = vsyncadd [#allocation6], %s24
      %s26 = sshll.u32 [#allocation5], 4
      %s27 = int_to_ptr.vmem [resolvable:$true] %s26
      %32 = dma.hbm_to_vmem [thread:$0]  %s1, 2048, %s27, [#allocation6], 128, 128, 8
    $region9: #{tpu_custom_call.1} parent=1 // pred_fallthru
      _
    // Predicated region
    $region10: #{tpu_custom_call.1} parent=1 // pred_check
      _
    $region11: #{tpu_custom_call.1} parent=1 // pred_check_branch
      %34 = sbr.rel (0) target = $region13
    $region12: #{tpu_custom_call.1} parent=1 // pred_region
      _
    $region13: #{tpu_custom_call.1} parent=1 // pred_fallthru
      _
    // Predicated region
    $region14: #{tpu_custom_call.1} parent=1 // pred_check
      _
    $region15: #{tpu_custom_call.1} parent=1 // pred_check_branch
      %36 = sbr.rel (0) target = $region17
    $region16: #{tpu_custom_call.1} parent=1 // pred_region
      %37 = dma.done [#allocation3], 128
    $region17: #{tpu_custom_call.1} parent=1 // pred_fallthru
      _
    // Predicated region
    $region18: #{tpu_custom_call.1} parent=1 // pred_check
      _
    $region19: #{tpu_custom_call.1} parent=1 // pred_check_branch
      %39 = sbr.rel (0) target = $region21
    $region20: #{tpu_custom_call.1} parent=1 // pred_region
      %40 = dma.done [#allocation6], 2048
    $region21: #{tpu_custom_call.1} parent=1 // pred_fallthru
      _
    %v41 = vld [vmem:[#allocation2] sm:$0xff]
    %v42 = vld [vmem:[#allocation5] sm:$0xff]
    %v43 = vld [vmem:[#allocation5 + $0x8] sm:$0xff]
    %v44 = vld [vmem:[#allocation5 + $0x10] sm:$0xff]
    %v45 = vld [vmem:[#allocation5 + $0x18] sm:$0xff]
    %v46 = vld [vmem:[#allocation5 + $0x20] sm:$0xff]
    %v47 = vld [vmem:[#allocation5 + $0x28] sm:$0xff]
    %v48 = vld [vmem:[#allocation5 + $0x30] sm:$0xff]
    %v49 = vld [vmem:[#allocation5 + $0x38] sm:$0xff]
    %v50 = vld [vmem:[#allocation5 + $0x40] sm:$0xff]
    %v51 = vld [vmem:[#allocation5 + $0x48] sm:$0xff]
    %v52 = vld [vmem:[#allocation5 + $0x50] sm:$0xff]
    %v53 = vld [vmem:[#allocation5 + $0x58] sm:$0xff]
    %v54 = vld [vmem:[#allocation5 + $0x60] sm:$0xff]
    %v55 = vld [vmem:[#allocation5 + $0x68] sm:$0xff]
    %v56 = vld [vmem:[#allocation5 + $0x70] sm:$0xff]
    %v57 = vld [vmem:[#allocation5 + $0x78] sm:$0xff]
    %58 = vmatprep.subr.mxu0 0.0
    %59 = vmatpush1.msra.mxu0 %v42
    %60 = vmatprep.subr.mxu0 0.0
    %61 = vmatpush1.msra.mxu0 %v43
    %62 = vmatprep.subr.mxu0 0.0
    %63 = vmatpush1.msra.mxu0 %v44
    %64 = vmatprep.subr.mxu0 0.0
    %65 = vmatpush1.msra.mxu0 %v45
    %66 = vmatprep.subr.mxu0 0.0
    %67 = vmatpush1.msra.mxu0 %v46
    %68 = vmatprep.subr.mxu0 0.0
    %69 = vmatpush1.msra.mxu0 %v47
    %70 = vmatprep.subr.mxu0 0.0
    %71 = vmatpush1.msra.mxu0 %v48
    %72 = vmatprep.subr.mxu0 0.0
    %73 = vmatpush1.msra.mxu0 %v49
    %74 = vmatprep.subr.mxu0 0.0
    %75 = vmatpush1.msra.mxu0 %v50
    %76 = vmatprep.subr.mxu0 0.0
    %77 = vmatpush1.msra.mxu0 %v51
    %78 = vmatprep.subr.mxu0 0.0
    %79 = vmatpush1.msra.mxu0 %v52
    %80 = vmatprep.subr.mxu0 0.0
    %81 = vmatpush1.msra.mxu0 %v53
    %82 = vmatprep.subr.mxu0 0.0
    %83 = vmatpush1.msra.mxu0 %v54
    %84 = vmatprep.subr.mxu0 0.0
    %85 = vmatpush1.msra.mxu0 %v55
    %86 = vmatprep.subr.mxu0 0.0
    %87 = vmatpush1.msra.mxu0 %v56
    %88 = vmatprep.subr.mxu0 0.0
    %89 = vmatpush1.msra.mxu0 %v57
    %90 = vmatprep.subr.mxu0 0.0
    %91 = vmatpush1.msra.mxu0 0.0
    %92 = vmatprep.subr.mxu0 0.0
    %93 = vmatpush1.msra.mxu0 0.0
    %94 = vmatprep.subr.mxu0 0.0
    %95 = vmatpush1.msra.mxu0 0.0
    %96 = vmatprep.subr.mxu0 0.0
    %97 = vmatpush1.msra.mxu0 0.0
    %98 = vmatprep.subr.mxu0 0.0
    %99 = vmatpush1.msra.mxu0 0.0
    %100 = vmatprep.subr.mxu0 0.0
    %101 = vmatpush1.msra.mxu0 0.0
    %102 = vmatprep.subr.mxu0 0.0
    %103 = vmatpush1.msra.mxu0 0.0
    %104 = vmatprep.subr.mxu0 0.0
    %105 = vmatpush1.msra.mxu0 0.0
    %106 = vmatprep.subr.mxu0 0.0
    %107 = vmatpush1.msra.mxu0 0.0
    %108 = vmatprep.subr.mxu0 0.0
    %109 = vmatpush1.msra.mxu0 0.0
    %110 = vmatprep.subr.mxu0 0.0
    %111 = vmatpush1.msra.mxu0 0.0
    %112 = vmatprep.subr.mxu0 0.0
    %113 = vmatpush1.msra.mxu0 0.0
    %114 = vmatprep.subr.mxu0 0.0
    %115 = vmatpush1.msra.mxu0 0.0
    %116 = vmatprep.subr.mxu0 0.0
    %117 = vmatpush1.msra.mxu0 0.0
    %118 = vmatprep.subr.mxu0 0.0
    %119 = vmatpush1.msra.mxu0 0.0
    %120 = vmatprep.subr.mxu0 0.0
    %121 = vmatpush1.msra.mxu0 0.0
    %122 = vmatprep.mubr.f32.mxu0 0.0
    %123 = vmatmul.mubr.f32.gmra.mrb[0].mxu0 %v41
    %v124 = vpop.f32.mrb[0].mxu0
    %v125 = vadd.f32 0.0, %v124
    %v126 = vpop.f32.mrb[0].mxu0
    %127 = vdwg.mxu0
    %p128 = scmp.eq.s32.totalorder 0, 0
    // Predicated region
    $region22: #{tpu_custom_call.1} parent=1 // pred_check
      %p129 = pneg %p128
    $region23: #{tpu_custom_call.1} parent=1 // pred_check_branch
      %131 = sbr.rel (%p129) target = $region25
    $region24: #{tpu_custom_call.1} parent=1 // pred_region
      %v132 = vld [vmem:[%s2] sm:$0x1]
      %v134 = vlaneseq
      %v135 = vshrl.u32 %v134, 7
      %v136 = vsub.s32 0, %v135
      %v137 = vrot.slane %v132, %v136
      %v139 = vadd.f32 %v137, %v125
      %140 = vst [vmem:[#allocation7] sm:$0xff] %v139
    $region25: #{tpu_custom_call.1} parent=1 // pred_fallthru
      _
    %p141 = scmp.ne.s32.totalorder 0, 0
    // Predicated region
    $region26: #{tpu_custom_call.1} parent=1 // pred_check
      %p142 = pneg %p141
    $region27: #{tpu_custom_call.1} parent=1 // pred_check_branch
      %144 = sbr.rel (%p142) target = $region29
    $region28: #{tpu_custom_call.1} parent=1 // pred_region
      %v145 = vld [vmem:[#allocation7] sm:$0xff]
      %v146 = vadd.f32 %v145, %v125
      %147 = vst [vmem:[#allocation7] sm:$0xff] %v146
    $region29: #{tpu_custom_call.1} parent=1 // pred_fallthru
      _
    // Predicated region
    $region30: #{tpu_custom_call.1} parent=1 // pred_check
      _
    $region31: #{tpu_custom_call.1} parent=1 // pred_check_branch
      %149 = sbr.rel (0) target = $region33
    $region32: #{tpu_custom_call.1} parent=1 // pred_region
      %s151 = ssub.s32 128, 128
      %152 = vsyncadd [#allocation4], %s151
      %s154 = sshll.u32 [#allocation7], 4
      %s155 = int_to_ptr.vmem [resolvable:$true] %s154
      %157 = dma.vmem_to_hbm [thread:$0]  %s155, 128, %s3, [#allocation4]
    $region33: #{tpu_custom_call.1} parent=1 // pred_fallthru
      _
    // Predicated region
    $region34: #{tpu_custom_call.1} parent=1 // pred_check
      _
    $region35: #{tpu_custom_call.1} parent=1 // pred_check_branch
      %159 = sbr.rel (0) target = $region37
    $region36: #{tpu_custom_call.1} parent=1 // pred_region
      %160 = dma.done [#allocation4], 128
    $region37: #{tpu_custom_call.1} parent=1 // pred_fallthru
      _
    %161 = vsyncpa [#allocation3], 1
    %162 = vsyncpa [#allocation6], 1
    %163 = vsyncpa [#allocation4], 1

</llo_original>
